<compile_context>
chip_gen: v5e
topology: v5e:2x2
jax: 0.10.0
libtpu: 0.0.40
codegen_flags: <defaults>
</compile_context>

<pallas_src>
import functools

import numpy as np
import jax
import jax.numpy as jnp
from jax import lax
from jax.experimental import pallas as pl
from jax.experimental.pallas import tpu as pltpu

INVALID_TOKEN_ID = -1


def _round_up(x, m):
    return ((x + m - 1) // m) * m


def _cdiv(a, b):
    return (a + b - 1) // b


# ----------------------------- kernel: row-wise argmax over vocab ----------------------
def _argmax_kernel(x_ref, out_ref, maxv_ref, maxi_ref, *, tv, cw, last_valid):
    """Grid = (row_blocks, vocab_tiles); vocab axis innermost ("arbitrary").

    Streams logits in their native dtype, reduces each (rt, tv) block in lane-chunks of
    width `cw`, and keeps a running (rt, 1) f32 max + int32 argmax in VMEM scratch across
    vocab tiles.  The vocab-tail mask only runs on the last vocab tile (interior tiles
    take a mask-free path selected by pl.when) and only on its true tail chunks.
    """
    k = pl.program_id(1)
    n_k = pl.num_programs(1)
    rt = x_ref.shape[0]
    base = k * tv                                    # global column offset of this tile

    @pl.when(k == 0)
    def _():
        maxv_ref[...] = jnp.full(maxv_ref.shape, -jnp.inf, maxv_ref.dtype)
        maxi_ref[...] = jnp.zeros(maxi_ref.shape, maxi_ref.dtype)

    col_local = lax.broadcasted_iota(jnp.int32, (rt, cw), 1)    # hoisted, reused
    neg = jnp.array(-jnp.inf, dtype=x_ref.dtype)

    def reduce_tile(masked):
        run_v = maxv_ref[...]
        run_i = maxi_ref[...]
        for c in range(tv // cw):
            off = c * cw
            xc = x_ref[:, pl.ds(off, cw)]            # native dtype (bf16 stays bf16)
            if masked and off + cw > last_valid:     # static: only real tail chunks
                xc = jnp.where(col_local < (last_valid - off), xc, neg)
            cmax = jnp.max(xc, axis=1, keepdims=True)
            cidx = jnp.min(jnp.where(xc == cmax, col_local, cw),
                           axis=1, keepdims=True) + (base + off)
            cmax32 = cmax.astype(jnp.float32)        # only (rt,1) gets widened
            better = cmax32 > run_v                  # strict > keeps earliest occurrence
            run_i = jnp.where(better, cidx, run_i)
            run_v = jnp.where(better, cmax32, run_v)
        maxv_ref[...] = run_v
        maxi_ref[...] = run_i

    if last_valid < tv:                              # vocab tail exists (static check)
        @pl.when(k < n_k - 1)
        def _():
            reduce_tile(masked=False)

        @pl.when(k == n_k - 1)
        def _():
            reduce_tile(masked=True)
    else:
        reduce_tile(masked=False)

    @pl.when(k == n_k - 1)
    def _():
        out_ref[...] = maxi_ref[...]
    # NOTE: boundary row blocks read unspecified padding rows; their results are garbage
    # but the out-of-range output rows are dropped by Pallas at writeback.
    # NOTE: an all-NaN / all -inf row yields index 0 (edge case only).


def _choose_tiles(T, V, itemsize, *, block_bytes=4 << 20, rt_default=256, max_tv=32768):
    """Pick (rt, tv, cw): ~block_bytes per input block, >=2 row blocks when possible
    (v7x 2-TC sharding), rt rounded to the dtype's sublane packing, tv a multiple of the
    lane-chunk width cw."""
    sublane = max(8, 32 // itemsize)                 # f32: 8, bf16: 16, int8/fp8: 32
    rt = min(rt_default, _round_up(T, sublane))
    if T > sublane and _cdiv(T, rt) < 2:             # force >=2 row blocks (v7x: 2 TCs)
        rt = _round_up(_cdiv(T, 2), sublane)
    tv = block_bytes // (rt * itemsize)
    tv = max(128, min(tv, max_tv, _round_up(V, 128)))
    if tv > 1024:
        tv = _round_up(tv, 1024)
        cw = 1024
    else:
        tv = _round_up(tv, 128)
        cw = tv
    return rt, tv, cw


def _argmax_pallas(logits, *, rt, tv, cw):
    T, V = logits.shape
    n_rows = _cdiv(T, rt)
    n_vtile = _cdiv(V, tv)
    last_valid = V - (n_vtile - 1) * tv              # valid columns in the last tile
    out = pl.pallas_call(
        functools.partial(_argmax_kernel, tv=tv, cw=cw, last_valid=last_valid),
        out_shape=jax.ShapeDtypeStruct((T, 1), jnp.int32),
        grid_spec=pltpu.PrefetchScalarGridSpec(
            num_scalar_prefetch=0,
            grid=(n_rows, n_vtile),
            in_specs=[pl.BlockSpec((rt, tv), lambda i, k: (i, k))],
            out_specs=pl.BlockSpec((rt, 1), lambda i, k: (i, 0)),
            scratch_shapes=[pltpu.VMEM((rt, 1), jnp.float32),
                            pltpu.VMEM((rt, 1), jnp.int32)],
        ),
        compiler_params=pltpu.CompilerParams(
            dimension_semantics=("parallel", "arbitrary"),   # rows shard across TCs
            vmem_limit_bytes=48 * 1024 * 1024,               # safe on v7x's 64 MiB
        ),
    )(logits)
    return out[:, 0]


def pallas_argmax_last_dim(logits, *, block_bytes=4 << 20, rt_default=256):
    """Row-wise argmax over the last (vocab) dim. logits: [T, V] any float dtype."""
    T, V = logits.shape
    rt, tv, cw = _choose_tiles(T, V, logits.dtype.itemsize,
                               block_bytes=block_bytes, rt_default=rt_default)
    return _argmax_pallas(logits, rt=rt, tv=tv, cw=cw)


# ----------------------------- fused device-side forward -------------------------------
@functools.partial(jax.jit, static_argnames=("rt", "tv", "cw"))
def _forward_device(logits, gather_idx, valid, spec_tok, *, rt, tv, cw):
    flat = _argmax_pallas(logits, rt=rt, tv=tv, cw=cw)              # [T] int32
    # Gather flat tokens into [B, max_spec_len+1] and run the rejection logic.  These
    # ops touch a few KB and fuse into the same XLA dispatch as the pallas_call above,
    # so there is no second kernel launch and no extra HBM round-trip.
    out_tok = jnp.where(valid, flat[gather_idx], INVALID_TOKEN_ID).astype(jnp.int32)
    W = out_tok.shape[1]
    col = jnp.arange(W, dtype=jnp.int32)[None, :]
    # prefix-accept + bonus: position j is emitted iff j <= first draft/target mismatch.
    first_neq = jnp.min(jnp.where(out_tok != spec_tok, col, W), axis=1, keepdims=True)
    return jnp.where(col <= first_neq, out_tok, INVALID_TOKEN_ID)


@functools.lru_cache(maxsize=256)
def _layout_tables(sample_lens):
    """Cached gather indices + validity mask for scattering flat tokens into [B, W]."""
    lens = np.asarray(sample_lens, dtype=np.int32)
    B = lens.shape[0]
    W = int(lens.max())                                  # = max_spec_len + 1
    starts = np.zeros(B, dtype=np.int32)
    starts[1:] = np.cumsum(lens[:-1])
    col = np.arange(W, dtype=np.int32)[None, :]
    valid = col < lens[:, None]
    gidx = starts[:, None] + np.minimum(col, lens[:, None] - 1)  # clamp keeps gather legal
    return jnp.asarray(gidx), jnp.asarray(valid)


def rejection_sampler_forward(logits, spec_token_ids, *, block_bytes=4 << 20,
                              rt_default=256):
    """Greedy forward_native. logits: [sum(len(s)+1), vocab]; spec_token_ids: list[list]."""
    sample_lens = tuple(len(s) + 1 for s in spec_token_ids)
    B = len(sample_lens)
    W = max(sample_lens)
    T, V = logits.shape
    assert T == sum(sample_lens)

    rt, tv, cw = _choose_tiles(T, V, logits.dtype.itemsize,
                               block_bytes=block_bytes, rt_default=rt_default)
    gather_idx, valid = _layout_tables(sample_lens)      # cached per sample_lens

    spec_np = np.full((B, W), INVALID_TOKEN_ID, dtype=np.int32)
    for i, s in enumerate(spec_token_ids):
        if len(s):
            spec_np[i, :len(s)] = np.asarray(s, dtype=np.int32)
    spec_tok = jnp.asarray(spec_np)

    # TODO(synk): torch reference returns int64 sampled ids; int32 is used here.
    return _forward_device(logits, gather_idx, valid, spec_tok, rt=rt, tv=tv, cw=cw)


# ----------------------------- numpy reference (torch semantics) -----------------------
def reference_forward_native(logits_np, spec_token_ids):
    spec_lens = [len(s) for s in spec_token_ids]
    sample_lens = [l + 1 for l in spec_lens]
    B, L = len(spec_token_ids), max(spec_lens)
    flat = logits_np.argmax(axis=-1)
    out = np.full((B, L + 1), INVALID_TOKEN_ID, dtype=np.int64)
    start = 0
    for i, sl in enumerate(sample_lens):
        out[i, :sl] = flat[start:start + sl]
        start += sl
    spec = np.full((B, L), INVALID_TOKEN_ID, dtype=np.int64)
    for i, s in enumerate(spec_token_ids):
        spec[i, :len(s)] = s
    accept = np.cumprod((out[:, :-1] == spec).astype(np.int64), axis=1)
    valid = out != INVALID_TOKEN_ID
    gen = np.concatenate([accept, np.zeros((B, 1), np.int64)], axis=1).astype(bool) & valid
    zeros_mask = ~gen
    first_zero = zeros_mask.argmax(axis=1)
    rows_with_zero = zeros_mask.any(axis=1)
    gen[rows_with_zero, first_zero[rows_with_zero]] = True
    out[~gen] = INVALID_TOKEN_ID
    return out


if __name__ == "__main__":
    key = jax.random.PRNGKey(0)
    k1, k2, k3, k4 = jax.random.split(key, 4)

    # ---- test 1: full forward semantics (accept + reject + bonus paths) ----
    vocab = 50
    spec_token_ids = [[1, 2, 3], [4, 5]]                # batch=2, max_spec_len=3
    sample_lens = [len(s) + 1 for s in spec_token_ids]
    T = sum(sample_lens)                                # 7 query tokens total
    logits = jax.random.normal(k1, (T, vocab), dtype=jnp.float32)
    # force known greedy targets so both accept and reject paths are exercised:
    # req0 targets [1,2,7,9] -> accepts spec [1,2], rejects 3, emits 7
    # req1 targets [4,5,8]   -> accepts spec [4,5], emits bonus 8
    targets = np.array([1, 2, 7, 9, 4, 5, 8], dtype=np.int32)
    logits = logits.at[np.arange(T), targets].add(100.0)
    sampled = jax.block_until_ready(rejection_sampler_forward(logits, spec_token_ids))
    ref = reference_forward_native(np.asarray(logits), spec_token_ids)
    assert np.array_equal(np.asarray(sampled), ref.astype(np.int32)), (sampled, ref)

    # ---- test 2: multi-row-block + partial vocab tile argmax ----
    big = jax.random.normal(k2, (300, 2500), dtype=jnp.float32)
    got = jax.block_until_ready(pallas_argmax_last_dim(big))
    want = np.argmax(np.asarray(big), axis=-1).astype(np.int32)
    assert np.array_equal(np.asarray(got), want), "multi-row-block argmax mismatch"

    # ---- test 3: native bf16 logits path (per-chunk compute stays bf16) ----
    bf = jax.random.normal(k3, (16, 640), dtype=jnp.float32).astype(jnp.bfloat16)
    got_bf = jax.block_until_ready(pallas_argmax_last_dim(bf))
    want_bf = np.argmax(np.asarray(bf, dtype=np.float32), axis=-1).astype(np.int32)
    assert np.array_equal(np.asarray(got_bf), want_bf), "bf16 argmax mismatch"

    # ---- test 4: multiple vocab tiles + chunked reduction + tail-only masking ----
    wide = jax.random.normal(k4, (600, 9000), dtype=jnp.float32)
    got_w = jax.block_until_ready(pallas_argmax_last_dim(wide))
    want_w = np.argmax(np.asarray(wide), axis=-1).astype(np.int32)
    assert np.array_equal(np.asarray(got_w), want_w), "multi-vocab-tile argmax mismatch"

    print("KERNEL_OK")
</pallas_src>

<mosaic_0001>
module attributes {stable_mosaic.version = 11 : i64} {
  func.func @_argmax_kernel(%arg0: i32, %arg1: i32, %arg2: memref<8x128xf32, #tpu.memory_space<vmem>>, %arg3: memref<8x1xi32, #tpu.memory_space<vmem>>, %arg4: memref<8x1xf32, #tpu.memory_space<vmem>>, %arg5: memref<8x1xi32, #tpu.memory_space<vmem>>) attributes {dimension_semantics = [#tpu.dimension_semantics<parallel>, #tpu.dimension_semantics<arbitrary>], iteration_bounds = array<i64: 1, 1>, scalar_prefetch = 0 : i64, scratch_operands = 2 : i64, tpu.core_type = #tpu.core_type<tc>, window_params = [{transform_indices = @transform_0, window_bounds = array<i64: 8, 128>}, {transform_indices = @transform_1, window_bounds = array<i64: 8, 1>}]} {
    %c128_i32 = arith.constant 128 : i32
    %0 = arith.muli %arg1, %c128_i32 : i32
    %c0_i32 = arith.constant 0 : i32
    %1 = arith.cmpi eq, %arg1, %c0_i32 : i32
    %2 = arith.extui %1 : i1 to i32
    %c0_i32_0 = arith.constant 0 : i32
    %3 = arith.cmpi ne, %2, %c0_i32_0 : i32
    scf.if %3 {
      %cst_7 = arith.constant 0xFF800000 : f32
      %14 = vector.broadcast %cst_7 : f32 to vector<8x1xf32>
      %c0 = arith.constant 0 : index
      %c0_8 = arith.constant 0 : index
      %15 = vector.load %arg4[%c0, %c0_8] : memref<8x1xf32, #tpu.memory_space<vmem>>, vector<8x1xf32>
      tpu.vector_store %arg4[%c0, %c0_8], %14 {strides = array<i32>} : memref<8x1xf32, #tpu.memory_space<vmem>>, vector<8x1xf32>,
      %c0_i32_9 = arith.constant 0 : i32
      %16 = vector.broadcast %c0_i32_9 : i32 to vector<8x1xi32>
      %c0_10 = arith.constant 0 : index
      %c0_11 = arith.constant 0 : index
      %17 = vector.load %arg5[%c0_10, %c0_11] : memref<8x1xi32, #tpu.memory_space<vmem>>, vector<8x1xi32>
      tpu.vector_store %arg5[%c0_10, %c0_11], %16 {strides = array<i32>} : memref<8x1xi32, #tpu.memory_space<vmem>>, vector<8x1xi32>,
    } else {
    }
    %4 = tpu.iota {dimensions = array<i32: 1>} : vector<8x128xi32>
    %c0_i32_1 = arith.constant 0 : i32
    %5 = arith.cmpi slt, %arg1, %c0_i32_1 : i32
    %6 = arith.extui %5 : i1 to i32
    %c0_i32_2 = arith.constant 0 : i32
    %7 = arith.cmpi ne, %6, %c0_i32_2 : i32
    scf.if %7 {
      %c0 = arith.constant 0 : index
      %c0_7 = arith.constant 0 : index
      %14 = vector.load %arg4[%c0, %c0_7] : memref<8x1xf32, #tpu.memory_space<vmem>>, vector<8x1xf32>
      %c0_8 = arith.constant 0 : index
      %c0_9 = arith.constant 0 : index
      %15 = vector.load %arg5[%c0_8, %c0_9] : memref<8x1xi32, #tpu.memory_space<vmem>>, vector<8x1xi32>
      %c0_10 = arith.constant 0 : index
      %c0_11 = arith.constant 0 : index
      %16 = vector.load %arg2[%c0_10, %c0_11] : memref<8x128xf32, #tpu.memory_space<vmem>>, vector<8x128xf32>
      %cst_12 = arith.constant dense<0xFF800000> : vector<8xf32>
      %17 = vector.multi_reduction <maximumf>, %16, %cst_12 [1] : vector<8x128xf32> to vector<8xf32>
      %18 = vector.shape_cast %17 : vector<8xf32> to vector<8x1xf32>
      %19 = vector.broadcast %18 : vector<8x1xf32> to vector<8x128xf32>
      %20 = arith.cmpf oeq, %16, %19 : vector<8x128xf32>
      %c128_i32_13 = arith.constant 128 : i32
      %21 = vector.broadcast %c128_i32_13 : i32 to vector<8x128xi32>
      %22 = arith.select %20, %4, %21 : vector<8x128xi1>, vector<8x128xi32>
      %cst_14 = arith.constant dense<2147483647> : vector<8xi32>
      %23 = vector.multi_reduction <minsi>, %22, %cst_14 [1] : vector<8x128xi32> to vector<8xi32>
      %24 = vector.shape_cast %23 : vector<8xi32> to vector<8x1xi32>
      %c0_i32_15 = arith.constant 0 : i32
      %25 = arith.addi %0, %c0_i32_15 : i32
      %26 = vector.broadcast %25 : i32 to vector<8x1xi32>
      %27 = arith.addi %24, %26 : vector<8x1xi32>
      %28 = arith.cmpf ogt, %18, %14 : vector<8x1xf32>
      %29 = arith.select %28, %27, %15 : vector<8x1xi1>, vector<8x1xi32>
      %30 = arith.select %28, %18, %14 : vector<8x1xi1>, vector<8x1xf32>
      %c0_16 = arith.constant 0 : index
      %c0_17 = arith.constant 0 : index
      %31 = vector.load %arg4[%c0_16, %c0_17] : memref<8x1xf32, #tpu.memory_space<vmem>>, vector<8x1xf32>
      tpu.vector_store %arg4[%c0_16, %c0_17], %30 {strides = array<i32>} : memref<8x1xf32, #tpu.memory_space<vmem>>, vector<8x1xf32>,
      %c0_18 = arith.constant 0 : index
      %c0_19 = arith.constant 0 : index
      %32 = vector.load %arg5[%c0_18, %c0_19] : memref<8x1xi32, #tpu.memory_space<vmem>>, vector<8x1xi32>
      tpu.vector_store %arg5[%c0_18, %c0_19], %29 {strides = array<i32>} : memref<8x1xi32, #tpu.memory_space<vmem>>, vector<8x1xi32>,
    } else {
    }
    %c0_i32_3 = arith.constant 0 : i32
    %8 = arith.cmpi eq, %arg1, %c0_i32_3 : i32
    %9 = arith.extui %8 : i1 to i32
    %cst = arith.constant 0xFF800000 : f32
    %c0_i32_4 = arith.constant 0 : i32
    %10 = arith.cmpi ne, %9, %c0_i32_4 : i32
    scf.if %10 {
      %c0 = arith.constant 0 : index
      %c0_7 = arith.constant 0 : index
      %14 = vector.load %arg4[%c0, %c0_7] : memref<8x1xf32, #tpu.memory_space<vmem>>, vector<8x1xf32>
      %c0_8 = arith.constant 0 : index
      %c0_9 = arith.constant 0 : index
      %15 = vector.load %arg5[%c0_8, %c0_9] : memref<8x1xi32, #tpu.memory_space<vmem>>, vector<8x1xi32>
      %c0_10 = arith.constant 0 : index
      %c0_11 = arith.constant 0 : index
      %16 = vector.load %arg2[%c0_10, %c0_11] : memref<8x128xf32, #tpu.memory_space<vmem>>, vector<8x128xf32>
      %c50_i32 = arith.constant 50 : i32
      %17 = vector.broadcast %c50_i32 : i32 to vector<8x128xi32>
      %18 = arith.cmpi slt, %4, %17 : vector<8x128xi32>
      %19 = vector.broadcast %cst : f32 to vector<8x128xf32>
      %20 = arith.select %18, %16, %19 : vector<8x128xi1>, vector<8x128xf32>
      %cst_12 = arith.constant dense<0xFF800000> : vector<8xf32>
      %21 = vector.multi_reduction <maximumf>, %20, %cst_12 [1] : vector<8x128xf32> to vector<8xf32>
      %22 = vector.shape_cast %21 : vector<8xf32> to vector<8x1xf32>
      %23 = vector.broadcast %22 : vector<8x1xf32> to vector<8x128xf32>
      %24 = arith.cmpf oeq, %20, %23 : vector<8x128xf32>
      %c128_i32_13 = arith.constant 128 : i32
      %25 = vector.broadcast %c128_i32_13 : i32 to vector<8x128xi32>
      %26 = arith.select %24, %4, %25 : vector<8x128xi1>, vector<8x128xi32>
      %cst_14 = arith.constant dense<2147483647> : vector<8xi32>
      %27 = vector.multi_reduction <minsi>, %26, %cst_14 [1] : vector<8x128xi32> to vector<8xi32>
      %28 = vector.shape_cast %27 : vector<8xi32> to vector<8x1xi32>
      %c0_i32_15 = arith.constant 0 : i32
      %29 = arith.addi %0, %c0_i32_15 : i32
      %30 = vector.broadcast %29 : i32 to vector<8x1xi32>
      %31 = arith.addi %28, %30 : vector<8x1xi32>
      %32 = arith.cmpf ogt, %22, %14 : vector<8x1xf32>
      %33 = arith.select %32, %31, %15 : vector<8x1xi1>, vector<8x1xi32>
      %34 = arith.select %32, %22, %14 : vector<8x1xi1>, vector<8x1xf32>
      %c0_16 = arith.constant 0 : index
      %c0_17 = arith.constant 0 : index
      %35 = vector.load %arg4[%c0_16, %c0_17] : memref<8x1xf32, #tpu.memory_space<vmem>>, vector<8x1xf32>
      tpu.vector_store %arg4[%c0_16, %c0_17], %34 {strides = array<i32>} : memref<8x1xf32, #tpu.memory_space<vmem>>, vector<8x1xf32>,
      %c0_18 = arith.constant 0 : index
      %c0_19 = arith.constant 0 : index
      %36 = vector.load %arg5[%c0_18, %c0_19] : memref<8x1xi32, #tpu.memory_space<vmem>>, vector<8x1xi32>
      tpu.vector_store %arg5[%c0_18, %c0_19], %33 {strides = array<i32>} : memref<8x1xi32, #tpu.memory_space<vmem>>, vector<8x1xi32>,
    } else {
    }
    %c0_i32_5 = arith.constant 0 : i32
    %11 = arith.cmpi eq, %arg1, %c0_i32_5 : i32
    %12 = arith.extui %11 : i1 to i32
    %c0_i32_6 = arith.constant 0 : i32
    %13 = arith.cmpi ne, %12, %c0_i32_6 : i32
    scf.if %13 {
      %c0 = arith.constant 0 : index
      %c0_7 = arith.constant 0 : index
      %14 = vector.load %arg5[%c0, %c0_7] : memref<8x1xi32, #tpu.memory_space<vmem>>, vector<8x1xi32>
      %c0_8 = arith.constant 0 : index
      %c0_9 = arith.constant 0 : index
      %15 = vector.load %arg3[%c0_8, %c0_9] : memref<8x1xi32, #tpu.memory_space<vmem>>, vector<8x1xi32>
      tpu.vector_store %arg3[%c0_8, %c0_9], %14 {strides = array<i32>} : memref<8x1xi32, #tpu.memory_space<vmem>>, vector<8x1xi32>,
    } else {
    }
    return
  }
  func.func @transform_0(%arg0: i32, %arg1: i32) -> (i32, i32) {
    %c0_i32 = arith.constant 0 : i32
    return %arg0, %arg1 : i32, i32
  }
  func.func @transform_1(%arg0: i32, %arg1: i32) -> (i32, i32) {
    %c0_i32 = arith.constant 0 : i32
    %c0_i32_0 = arith.constant 0 : i32
    return %arg0, %c0_i32 : i32, i32
  }
}

</mosaic_0001>

<llo_original>
// kernel: _forward_device.1
$region0: #{_forward_device.1}
  #allocation0 [shape = 'u32[]', space=smem, size = 0x4, offset = 0x4, fixed_abs, tag = 'smem constant byte address 0x4 - core index']
  #allocation1 [shape = 'u32[72,128]{1,0:T(1,128)}', space=vmem, size = 0x9000, scoped, tag = 'internal scratch']
  #allocation2 [shape = 'f32[8,1]{1,0:T(8,128)}', space=vmem, size = 0x1000, scoped, tag = 'scratch operand']
  #allocation3 [shape = 's32[8,1]{1,0:T(8,128)}', space=vmem, size = 0x1000, scoped, tag = 'scratch operand']
  %s0 = inlined_call_operand.hbm [shape: f32[7,50], index: 0, kind: input, shape index: {}]
  %s1 = inlined_call_operand.vmem [shape: s32[7,1], index: 1, kind: output, shape index: {}]
  %s2 = sld [smem:[#allocation0]]
  $region30: #{_forward_device.1} parent=0
    _
  %s4 = ssub.s32 1, %s2
  %s5 = scalar_select 0, %s4, %s2
  $region1: #{_forward_device.1} parent=0
    #allocation4 [shape = 'u8[4096]{0}', space=vmem, size = 0x1000, scoped, tag = 'input window, operand 0, single buffered']
    #allocation5 [shape = 's32[1]{0}', space=sflag, size = 0x4, scoped, tag = 'scoped memory for _forward_device.1']
    %6 = vsyncpa [#allocation5], 0
    // Predicated region
    $region2: #{_forward_device.1} parent=1 // pred_check
      _
    $region3: #{_forward_device.1} parent=1 // pred_check_branch
      %8 = sbr.rel (0) target = $region5
    $region4: #{_forward_device.1} parent=1 // pred_region
      %10 = vsyncadd [#allocation5], 0
      %s12 = sshll.u32 %s0, 4
      %s13 = int_to_ptr.hbm [resolvable:$true] %s12
      %s14 = sshll.u32 [#allocation4], 4
      %s15 = int_to_ptr.vmem [resolvable:$true] %s14
      %17 = dma.hbm_to_vmem [thread:$0]  %s13, 128, %s15, [#allocation5]
    $region5: #{_forward_device.1} parent=1 // pred_fallthru
      _
    // Predicated region
    $region6: #{_forward_device.1} parent=1 // pred_check
      _
    $region7: #{_forward_device.1} parent=1 // pred_check_branch
      %19 = sbr.rel (0) target = $region9
    $region8: #{_forward_device.1} parent=1 // pred_region
      %21 = dma.done [#allocation5], 128
    $region9: #{_forward_device.1} parent=1 // pred_fallthru
      _
    %s22 = smul.u32 0, 128
    %p23 = scmp.eq.s32.totalorder 0, 0
    // Predicated region
    $region10: #{_forward_device.1} parent=1 // pred_check
      %p24 = pneg %p23
    $region11: #{_forward_device.1} parent=1 // pred_check_branch
      %26 = sbr.rel (%p24) target = $region13
    $region12: #{_forward_device.1} parent=1 // pred_region
      %vm27 = vcmask 7168
      %28 = vst.msk [vmem:[#allocation2] sm:$0xff] %vm27, -inf
      %29 = vst.msk [vmem:[#allocation3] sm:$0xff] %vm27, 0
    $region13: #{_forward_device.1} parent=1 // pred_fallthru
      _
    %v30 = vlaneseq
    %v31 = vand.u32 %v30, 127
    %p32 = scmp.lt.s32.totalorder 0, 0
    // Predicated region
    $region14: #{_forward_device.1} parent=1 // pred_check
      %p33 = pneg %p32
    $region15: #{_forward_device.1} parent=1 // pred_check_branch
      %35 = sbr.rel (%p33) target = $region17
    $region16: #{_forward_device.1} parent=1 // pred_region
      %v36 = vld [vmem:[#allocation2] sm:$0xff]
      %v37 = vld [vmem:[#allocation3] sm:$0xff]
      %v38 = vld [vmem:[#allocation4] sm:$0xff]
      %39 = vmax.xlane.f32.xlu0 %v38
      %v40 = vpop.xlane.xlu0 %39
      %vm41 = vcmp.eq.f32.partialorder %v38, %v40
      %v42 = vsel %vm41, %v31, 128
      %v43 = vand.u32 %v42, 65535
      %v44 = vshra.s32 %v42, 16
      %v45 = vcvt.s32.f32 %v43
      %v46 = vcvt.s32.f32 %v44
      %47 = vmin.xlane.f32.xlu0 %v46
      %v48 = vpop.xlane.xlu0 %47
      %vm49 = vcmp.eq.f32.partialorder %v46, %v48
      %v50 = vsel %vm49, %v45, inf
      %51 = vmin.xlane.f32.xlu0 %v50
      %v52 = vpop.xlane.xlu0 %51
      %v53 = vcvt.f32.s32 %v52
      %v54 = vcvt.f32.s32 %v48
      %v55 = vshll.u32 %v54, 16
      %v56 = vadd.s32 %v55, %v53
      %v57 = vstv %s22
      %v58 = vadd.s32 %v56, %v57
      %vm59 = vcmp.gt.f32.partialorder %v40, %v36
      %v60 = vsel %vm59, %v58, %v37
      %v61 = vsel %vm59, %v40, %v36
      %vm62 = vcmask 7168
      %63 = vst.msk [vmem:[#allocation2] sm:$0xff] %vm62, %v61
      %64 = vst.msk [vmem:[#allocation3] sm:$0xff] %vm62, %v60
    $region17: #{_forward_device.1} parent=1 // pred_fallthru
      _
    // Predicated region
    $region18: #{_forward_device.1} parent=1 // pred_check
      %p65 = pneg %p23
    $region19: #{_forward_device.1} parent=1 // pred_check_branch
      %67 = sbr.rel (%p65) target = $region21
    $region20: #{_forward_device.1} parent=1 // pred_region
      %v68 = vld [vmem:[#allocation2] sm:$0xff]
      %v69 = vld [vmem:[#allocation3] sm:$0xff]
      %v70 = vld [vmem:[#allocation4] sm:$0xff]
      %vm71 = vcmp.lt.s32.totalorder %v31, 50
      %v72 = vsel %vm71, %v70, -inf
      %73 = vmax.xlane.f32.xlu0 %v72
      %v74 = vpop.xlane.xlu0 %73
      %vm75 = vcmp.eq.f32.partialorder %v72, %v74
      %v76 = vsel %vm75, %v31, 128
      %v77 = vand.u32 %v76, 65535
      %v78 = vshra.s32 %v76, 16
      %v79 = vcvt.s32.f32 %v77
      %v80 = vcvt.s32.f32 %v78
      %81 = vmin.xlane.f32.xlu0 %v80
      %v82 = vpop.xlane.xlu0 %81
      %vm83 = vcmp.eq.f32.partialorder %v80, %v82
      %v84 = vsel %vm83, %v79, inf
      %85 = vmin.xlane.f32.xlu0 %v84
      %v86 = vpop.xlane.xlu0 %85
      %v87 = vcvt.f32.s32 %v86
      %v88 = vcvt.f32.s32 %v82
      %v89 = vshll.u32 %v88, 16
      %v90 = vadd.s32 %v89, %v87
      %v91 = vstv %s22
      %v92 = vadd.s32 %v90, %v91
      %vm93 = vcmp.gt.f32.partialorder %v74, %v68
      %v94 = vsel %vm93, %v92, %v69
      %v95 = vsel %vm93, %v74, %v68
      %vm96 = vcmask 7168
      %97 = vst.msk [vmem:[#allocation2] sm:$0xff] %vm96, %v95
      %98 = vst.msk [vmem:[#allocation3] sm:$0xff] %vm96, %v94
      %v99 = vld [vmem:[#allocation3] sm:$0xff]
      %100 = vst.msk [vmem:[%s1] sm:$0xff] %vm96, %v99
    $region21: #{_forward_device.1} parent=1 // pred_fallthru
      _
    // Predicated region
    $region22: #{_forward_device.1} parent=1 // pred_check
      _
    $region23: #{_forward_device.1} parent=1 // pred_check_branch
      %102 = sbr.rel (0) target = $region25
    $region24: #{_forward_device.1} parent=1 // pred_region
      _
    $region25: #{_forward_device.1} parent=1 // pred_fallthru
      _
    // Predicated region
    $region26: #{_forward_device.1} parent=1 // pred_check
      _
    $region27: #{_forward_device.1} parent=1 // pred_check_branch
      %104 = sbr.rel (0) target = $region29
    $region28: #{_forward_device.1} parent=1 // pred_region
      _
    $region29: #{_forward_device.1} parent=1 // pred_fallthru
      _
    %105 = vsyncpa [#allocation5], 1

</llo_original>
